<compile_context>
chip_gen: v7x
topology: tpu7x:2x2x1
jax: 0.10.0
libtpu: 0.0.40
codegen_flags: <defaults>
</compile_context>

<pallas_src>
import jax
import jax.numpy as jnp
from jax.experimental import pallas as pl
from jax.experimental.pallas import tpu as pltpu


def _round_up(n, m):
    return ((n + m - 1) // m) * m


def _tpu_traits():
    """Best-effort (wide_mxu, multi_tensorcore) from the local device kind."""
    kind = ""
    try:
        kind = (jax.devices()[0].device_kind or "").lower()
    except Exception:
        pass
    is_pre_v6 = any(t in kind for t in ("v2", "v3", "v4", "v5"))
    wide_mxu = not is_pre_v6                       # v6e/v7x: 256-wide MXU
    multi_tc = any(t in kind for t in ("v4", "v5p", "v7"))  # 2 TensorCores/chip
    return wide_mxu, multi_tc


def _select_pack(m, h2, wide_mxu):
    """Fold `pack` consecutive points into one kernel row (block-diagonal weights).

    Goals: (a) output block a multiple of 128 lanes -> unmasked vst,
           (b) layer-2 N dim <= native MXU width (256 on v6e/v7x, 128 on v5e),
           (c) m % pack == 0 so wrapper reshapes stay free bitcasts (no pad/copy).
    """
    n_cap = 256 if wide_mxu else 128
    cands = [p for p in (16, 8, 4, 2) if m % p == 0 and h2 * p <= max(n_cap, h2)]
    for p in cands:                       # prefer lane-dense (multiple of 128) stores
        if (h2 * p) % 128 == 0:
            return p
    return cands[0] if cands else 1


def _mlp_kernel(x_ref, w1_ref, b1_ref, w2_ref, b2_ref, o_ref):
    """Fused 2-layer MLP: ReLU(ReLU(x @ W1 + b1) @ W2 + b2) for one row tile."""
    x = x_ref[...]
    # Layer 1: MXU matmul (f32 accumulate) + VPU bias-add / ReLU.
    h = jnp.dot(x, w1_ref[...], preferred_element_type=jnp.float32)
    h = jnp.maximum(h + b1_ref[...], 0.0)
    # Layer 2.
    y = jnp.dot(h, w2_ref[...], preferred_element_type=jnp.float32)
    y = jnp.maximum(y + b2_ref[...], 0.0)
    o_ref[...] = y.astype(o_ref.dtype)


def feature_extractor(x, w1, b1, w2, b2, *, tm=8192):
    """Pallas-fused FeatureExtractor forward.

    x : (M, D_in) float32
    w1: (D_in, H1), b1: (H1,)     (weights stored (in, out) = W.T vs PyTorch)
    w2: (H1, H2),  b2: (H2,)
    returns (M, H2) float32
    """
    M, d_in = x.shape
    h1 = w1.shape[1]
    h2 = w2.shape[1]
    dtype = jnp.float32

    wide_mxu, multi_tc = _tpu_traits()
    pack = _select_pack(M, h2, wide_mxu)
    din_p, h1_p, h2_p = d_in * pack, h1 * pack, h2 * pack

    # ---- Lane-dense packing via block-diagonal weights (zero extra HBM bytes) ----
    if pack > 1:
        w1_p = jax.scipy.linalg.block_diag(*([w1] * pack)).astype(dtype)
        w2_p = jax.scipy.linalg.block_diag(*([w2] * pack)).astype(dtype)
        b1_p = jnp.tile(b1, pack).reshape(1, h1_p).astype(dtype)
        b2_p = jnp.tile(b2, pack).reshape(1, h2_p).astype(dtype)
    else:
        w1_p, w2_p = w1.astype(dtype), w2.astype(dtype)
        b1_p = b1.reshape(1, h1).astype(dtype)
        b2_p = b2.reshape(1, h2).astype(dtype)

    rows = M // pack                       # packed rows (M % pack == 0 by selection)
    x_p = x.reshape(rows, din_p)           # free: same bytes row-major

    # ---- Row tiling: big tiles, balanced across the grid, cdiv partial last block ----
    tr_target = max(8, ((max(tm, 8) // pack) // 8) * 8)
    if rows <= tr_target:
        if multi_tc and rows >= 64:
            # Multi-TensorCore chips (v7x): two balanced tiles so both TCs get work.
            tr = _round_up(pl.cdiv(rows, 2), 8)
        else:
            tr = rows                      # one exact tile (block == full array dims)
    else:
        n_tiles = pl.cdiv(rows, tr_target)
        tr = _round_up(pl.cdiv(rows, n_tiles), 8)   # balanced; last tile never ~empty
    grid = (pl.cdiv(rows, tr),)

    flops = 2 * M * (d_in * h1 + h1 * h2)
    bytes_accessed = 4 * (M * d_in + M * h2
                          + din_p * h1_p + h1_p + h1_p * h2_p + h2_p)

    out_packed = pl.pallas_call(
        _mlp_kernel,
        out_shape=jax.ShapeDtypeStruct((rows, h2_p), dtype),
        grid_spec=pltpu.PrefetchScalarGridSpec(
            num_scalar_prefetch=0,
            grid=grid,
            in_specs=[
                pl.BlockSpec((tr, din_p), lambda i: (i, 0)),    # x row tile
                pl.BlockSpec((din_p, h1_p), lambda i: (0, 0)),  # W1 (VMEM-resident)
                pl.BlockSpec((1, h1_p), lambda i: (0, 0)),      # b1
                pl.BlockSpec((h1_p, h2_p), lambda i: (0, 0)),   # W2 (VMEM-resident)
                pl.BlockSpec((1, h2_p), lambda i: (0, 0)),      # b2
            ],
            out_specs=pl.BlockSpec((tr, h2_p), lambda i: (i, 0)),
        ),
        compiler_params=pltpu.CompilerParams(
            dimension_semantics=("parallel",),
            vmem_limit_bytes=32 << 20,
        ),
        cost_estimate=pl.CostEstimate(
            flops=flops, transcendentals=0, bytes_accessed=bytes_accessed),
    )(x_p, w1_p, b1_p, w2_p, b2_p)

    return out_packed.reshape(M, h2)       # free: same bytes row-major


# ----------------------------------------------------------------------------------
# Reference + test harness
# ----------------------------------------------------------------------------------
def init_params(key, input_dim, hidden_dims):
    """Deterministic synthetic params. Weights stored (in, out) = W.T vs PyTorch."""
    params = []
    prev = input_dim
    for h in hidden_dims:
        key, kw, kb = jax.random.split(key, 3)
        bound = 1.0 / jnp.sqrt(prev)
        w = jax.random.uniform(kw, (prev, h), jnp.float32, -bound, bound)
        b = jax.random.uniform(kb, (h,), jnp.float32, -bound, bound)
        params.append((w, b))
        prev = h
    return params


def reference_forward(x, params):
    h = x
    for w, b in params:
        h = jnp.maximum(
            jnp.dot(h, w, precision=jax.lax.Precision.HIGHEST) + b, 0.0)
    return h


if __name__ == "__main__":
    key = jax.random.PRNGKey(0)
    input_dim = 8
    hidden_dims = [32, 64]

    key, kx = jax.random.split(key)
    params = init_params(key, input_dim, hidden_dims)
    (w1, b1), (w2, b2) = params

    def check(x, **kw):
        out = jax.block_until_ready(feature_extractor(x, w1, b1, w2, b2, **kw))
        ref = reference_forward(x, params)
        assert out.shape == (x.shape[0], hidden_dims[-1]), out.shape
        assert jnp.allclose(out, ref, atol=1e-4, rtol=1e-4), (
            f"mismatch for shape {x.shape}, kwargs={kw}")

    # 1) Small case: packed, single exact tile.
    key, k1 = jax.random.split(key)
    check(jax.random.normal(k1, (16, input_dim), jnp.float32))

    # 2) Ragged case: M=300 (divisible by pack, rows not a multiple of 8).
    key, k2 = jax.random.split(key)
    x_ragged = jax.random.normal(k2, (300, input_dim), jnp.float32)
    check(x_ragged)

    # 3) Multi-tile case with a partial final block (no wrapper pad/slice).
    check(x_ragged, tm=128)

    # 4) Odd M: pack falls back to 1 (masked lane stores, still no HBM copies).
    key, k3 = jax.random.split(key)
    check(jax.random.normal(k3, (37, input_dim), jnp.float32))

    print("KERNEL_OK")
</pallas_src>

<mosaic_0001>
module attributes {stable_mosaic.version = 11 : i64} {
  func.func @_mlp_kernel(%arg0: i32, %arg1: memref<4x32xf32, #tpu.memory_space<vmem>>, %arg2: memref<32x128xf32, #tpu.memory_space<vmem>>, %arg3: memref<1x128xf32, #tpu.memory_space<vmem>>, %arg4: memref<128x256xf32, #tpu.memory_space<vmem>>, %arg5: memref<1x256xf32, #tpu.memory_space<vmem>>, %arg6: memref<4x256xf32, #tpu.memory_space<vmem>>) attributes {dimension_semantics = [#tpu.dimension_semantics<parallel>], iteration_bounds = array<i64: 1>, scalar_prefetch = 0 : i64, scratch_operands = 0 : i64, tpu.core_type = #tpu.core_type<tc>, window_params = [{transform_indices = @transform_0, window_bounds = array<i64: 4, 32>}, {pipeline_mode = #tpu.pipeline_mode<synchronous>, transform_indices = @transform_1, window_bounds = array<i64: 32, 128>}, {pipeline_mode = #tpu.pipeline_mode<synchronous>, transform_indices = @transform_2, window_bounds = array<i64: 1, 128>}, {pipeline_mode = #tpu.pipeline_mode<synchronous>, transform_indices = @transform_3, window_bounds = array<i64: 128, 256>}, {pipeline_mode = #tpu.pipeline_mode<synchronous>, transform_indices = @transform_4, window_bounds = array<i64: 1, 256>}, {transform_indices = @transform_5, window_bounds = array<i64: 4, 256>}]} {
    %c0 = arith.constant 0 : index
    %c0_0 = arith.constant 0 : index
    %0 = vector.load %arg1[%c0, %c0_0] : memref<4x32xf32, #tpu.memory_space<vmem>>, vector<4x32xf32>
    %c0_1 = arith.constant 0 : index
    %c0_2 = arith.constant 0 : index
    %1 = vector.load %arg2[%c0_1, %c0_2] : memref<32x128xf32, #tpu.memory_space<vmem>>, vector<32x128xf32>
    %cst = arith.constant dense<0.000000e+00> : vector<4x128xf32>
    %2 = tpu.matmul %0, %1, %cst {dimension_numbers = #tpu.dot_dimension_numbers<[1], [0], [0], [1], [0, 0, 1, 1], [], []>} : vector<4x32xf32>, vector<32x128xf32>, vector<4x128xf32> -> vector<4x128xf32>
    %c0_3 = arith.constant 0 : index
    %c0_4 = arith.constant 0 : index
    %3 = vector.load %arg3[%c0_3, %c0_4] : memref<1x128xf32, #tpu.memory_space<vmem>>, vector<1x128xf32>
    %4 = vector.broadcast %3 : vector<1x128xf32> to vector<4x128xf32>
    %5 = arith.addf %2, %4 : vector<4x128xf32>
    %cst_5 = arith.constant 0.000000e+00 : f32
    %6 = vector.broadcast %cst_5 : f32 to vector<4x128xf32>
    %7 = arith.maximumf %5, %6 : vector<4x128xf32>
    %c0_6 = arith.constant 0 : index
    %c0_7 = arith.constant 0 : index
    %8 = vector.load %arg4[%c0_6, %c0_7] : memref<128x256xf32, #tpu.memory_space<vmem>>, vector<128x256xf32>
    %cst_8 = arith.constant dense<0.000000e+00> : vector<4x256xf32>
    %9 = tpu.matmul %7, %8, %cst_8 {dimension_numbers = #tpu.dot_dimension_numbers<[1], [0], [0], [1], [0, 0, 1, 1], [], []>} : vector<4x128xf32>, vector<128x256xf32>, vector<4x256xf32> -> vector<4x256xf32>
    %c0_9 = arith.constant 0 : index
    %c0_10 = arith.constant 0 : index
    %10 = vector.load %arg5[%c0_9, %c0_10] : memref<1x256xf32, #tpu.memory_space<vmem>>, vector<1x256xf32>
    %11 = vector.broadcast %10 : vector<1x256xf32> to vector<4x256xf32>
    %12 = arith.addf %9, %11 : vector<4x256xf32>
    %cst_11 = arith.constant 0.000000e+00 : f32
    %13 = vector.broadcast %cst_11 : f32 to vector<4x256xf32>
    %14 = arith.maximumf %12, %13 : vector<4x256xf32>
    %c0_12 = arith.constant 0 : index
    %c0_13 = arith.constant 0 : index
    %15 = vector.load %arg6[%c0_12, %c0_13] : memref<4x256xf32, #tpu.memory_space<vmem>>, vector<4x256xf32>
    tpu.vector_store %arg6[%c0_12, %c0_13], %14 {strides = array<i32>} : memref<4x256xf32, #tpu.memory_space<vmem>>, vector<4x256xf32>,
    return
  }
  func.func @transform_0(%arg0: i32) -> (i32, i32) {
    %c0_i32 = arith.constant 0 : i32
    %c0_i32_0 = arith.constant 0 : i32
    return %arg0, %c0_i32 : i32, i32
  }
  func.func @transform_1(%arg0: i32) -> (i32, i32) {
    %c0_i32 = arith.constant 0 : i32
    %c0_i32_0 = arith.constant 0 : i32
    %c0_i32_1 = arith.constant 0 : i32
    return %c0_i32, %c0_i32_0 : i32, i32
  }
  func.func @transform_2(%arg0: i32) -> (i32, i32) {
    %c0_i32 = arith.constant 0 : i32
    %c0_i32_0 = arith.constant 0 : i32
    %c0_i32_1 = arith.constant 0 : i32
    return %c0_i32, %c0_i32_0 : i32, i32
  }
  func.func @transform_3(%arg0: i32) -> (i32, i32) {
    %c0_i32 = arith.constant 0 : i32
    %c0_i32_0 = arith.constant 0 : i32
    %c0_i32_1 = arith.constant 0 : i32
    return %c0_i32, %c0_i32_0 : i32, i32
  }
  func.func @transform_4(%arg0: i32) -> (i32, i32) {
    %c0_i32 = arith.constant 0 : i32
    %c0_i32_0 = arith.constant 0 : i32
    %c0_i32_1 = arith.constant 0 : i32
    return %c0_i32, %c0_i32_0 : i32, i32
  }
  func.func @transform_5(%arg0: i32) -> (i32, i32) {
    %c0_i32 = arith.constant 0 : i32
    %c0_i32_0 = arith.constant 0 : i32
    return %arg0, %c0_i32 : i32, i32
  }
}

</mosaic_0001>

<llo_original>
// kernel: tpu_custom_call.1
$region0: #{tpu_custom_call.1}
  #allocation0 [shape = 'u32[]', space=smem, size = 0x4, offset = 0x4, fixed_abs, tag = 'smem constant byte address 0x4 - core index']
  #allocation1 [shape = 'u32[144,128]{1,0:T(1,128)}', space=vmem, size = 0x12000, scoped, tag = 'internal scratch']
  %s0 = inlined_call_operand.hbm [shape: f32[4,32], index: 0, kind: input, shape index: {}]
  %s1 = inlined_call_operand.hbm [shape: f32[32,128], index: 1, kind: input, shape index: {}]
  %s2 = inlined_call_operand.vmem [shape: f32[1,128], index: 2, kind: input, shape index: {}]
  %s3 = inlined_call_operand.hbm [shape: f32[128,256], index: 3, kind: input, shape index: {}]
  %s4 = inlined_call_operand.vmem [shape: f32[1,256], index: 4, kind: input, shape index: {}]
  %s5 = inlined_call_operand.hbm [shape: f32[4,256], index: 5, kind: output, shape index: {}]
  %s6 = sld [smem:[#allocation0]]
  $region42: #{tpu_custom_call.1} parent=0
    _
  %s8 = ssub.s32 1, %s6
  %s9 = scalar_select 0, %s8, %s6
  $region1: #{tpu_custom_call.1} parent=0
    #allocation2 [shape = 'u8[2048]{0}', space=vmem, size = 0x800, scoped, tag = 'input window, operand 0, single buffered']
    #allocation3 [shape = 's32[1]{0}', space=sflag, size = 0x4, scoped, tag = 'scoped memory for tpu_custom_call.1']
    #allocation4 [shape = 's32[1]{0}', space=sflag, size = 0x4, scoped, tag = 'scoped memory for tpu_custom_call.1']
    #allocation5 [shape = 'u8[16384]{0}', space=vmem, size = 0x4000, scoped, tag = 'input window, operand 1, single buffered']
    #allocation6 [shape = 's32[1]{0}', space=sflag, size = 0x4, scoped, tag = 'scoped memory for tpu_custom_call.1']
    #allocation7 [shape = 'u8[131072]{0}', space=vmem, size = 0x20000, scoped, tag = 'input window, operand 3, single buffered']
    #allocation8 [shape = 'u8[4096]{0}', space=vmem, size = 0x1000, scoped, tag = 'output window, operand 0, single buffered']
    %10 = vsyncpa [#allocation3], 0
    %11 = vsyncpa [#allocation6], 0
    %12 = vsyncpa [#allocation4], 0
    // Predicated region
    $region2: #{tpu_custom_call.1} parent=1 // pred_check
      _
    $region3: #{tpu_custom_call.1} parent=1 // pred_check_branch
      %14 = sbr.rel (0) target = $region5
    $region4: #{tpu_custom_call.1} parent=1 // pred_region
      %s16 = ssub.s32 64, 64
      %17 = vsyncadd [#allocation3], %s16
      %s19 = sshll.u32 [#allocation2], 4
      %s20 = int_to_ptr.vmem [resolvable:$true] %s19
      %22 = dma.hbm_to_vmem [thread:$0]  %s0, 64, %s20, [#allocation3]
    $region5: #{tpu_custom_call.1} parent=1 // pred_fallthru
      _
    // Predicated region
    $region6: #{tpu_custom_call.1} parent=1 // pred_check
      _
    $region7: #{tpu_custom_call.1} parent=1 // pred_check_branch
      %24 = sbr.rel (0) target = $region9
    $region8: #{tpu_custom_call.1} parent=1 // pred_region
      %s26 = ssub.s32 512, 512
      %27 = vsyncadd [#allocation6], %s26
      %s28 = sshll.u32 [#allocation5], 4
      %s29 = int_to_ptr.vmem [resolvable:$true] %s28
      %34 = dma.hbm_to_vmem [thread:$0]  %s1, 512, %s29, [#allocation6], 128, 128, 8
    $region9: #{tpu_custom_call.1} parent=1 // pred_fallthru
      _
    // Predicated region
    $region10: #{tpu_custom_call.1} parent=1 // pred_check
      _
    $region11: #{tpu_custom_call.1} parent=1 // pred_check_branch
      %36 = sbr.rel (0) target = $region13
    $region12: #{tpu_custom_call.1} parent=1 // pred_region
      _
    $region13: #{tpu_custom_call.1} parent=1 // pred_fallthru
      _
    // Predicated region
    $region14: #{tpu_custom_call.1} parent=1 // pred_check
      _
    $region15: #{tpu_custom_call.1} parent=1 // pred_check_branch
      %38 = sbr.rel (0) target = $region17
    $region16: #{tpu_custom_call.1} parent=1 // pred_region
      %s40 = ssub.s32 4096, 4096
      %41 = vsyncadd [#allocation6], %s40
      %s42 = sshll.u32 [#allocation7], 4
      %s43 = int_to_ptr.vmem [resolvable:$true] %s42
      %48 = dma.hbm_to_vmem [thread:$0]  %s3, 4096, %s43, [#allocation6], 256, 256, 16
    $region17: #{tpu_custom_call.1} parent=1 // pred_fallthru
      _
    // Predicated region
    $region18: #{tpu_custom_call.1} parent=1 // pred_check
      _
    $region19: #{tpu_custom_call.1} parent=1 // pred_check_branch
      %50 = sbr.rel (0) target = $region21
    $region20: #{tpu_custom_call.1} parent=1 // pred_region
      _
    $region21: #{tpu_custom_call.1} parent=1 // pred_fallthru
      _
    // Predicated region
    $region22: #{tpu_custom_call.1} parent=1 // pred_check
      _
    $region23: #{tpu_custom_call.1} parent=1 // pred_check_branch
      %52 = sbr.rel (0) target = $region25
    $region24: #{tpu_custom_call.1} parent=1 // pred_region
      %53 = dma.done [#allocation3], 64
    $region25: #{tpu_custom_call.1} parent=1 // pred_fallthru
      _
    // Predicated region
    $region26: #{tpu_custom_call.1} parent=1 // pred_check
      _
    $region27: #{tpu_custom_call.1} parent=1 // pred_check_branch
      %55 = sbr.rel (0) target = $region29
    $region28: #{tpu_custom_call.1} parent=1 // pred_region
      %56 = dma.done [#allocation6], 512
    $region29: #{tpu_custom_call.1} parent=1 // pred_fallthru
      _
    // Predicated region
    $region30: #{tpu_custom_call.1} parent=1 // pred_check
      _
    $region31: #{tpu_custom_call.1} parent=1 // pred_check_branch
      %58 = sbr.rel (0) target = $region33
    $region32: #{tpu_custom_call.1} parent=1 // pred_region
      %59 = dma.done [#allocation6], 4096
    $region33: #{tpu_custom_call.1} parent=1 // pred_fallthru
      _
    %v60 = vld [vmem:[#allocation2] sm:$0xf]
    %v61 = vld [vmem:[#allocation5] sm:$0xff]
    %v62 = vld [vmem:[#allocation5 + $0x8] sm:$0xff]
    %v63 = vld [vmem:[#allocation5 + $0x10] sm:$0xff]
    %v64 = vld [vmem:[#allocation5 + $0x18] sm:$0xff]
    %v65 = vld [vmem:[%s2] sm:$0x1]
    %v67 = vlaneseq
    %v68 = vshrl.u32 %v67, 7
    %v69 = vsub.s32 0, %v68
    %v70 = vrot.slane %v65, %v69
    %vm72 = vcmask 261120
    %v74 = vsel %vm72, %v60, 0
    %76 = vmatprep.subr.mxu0 0.0
    %77 = vmatpush1.msra.mxu0 %v61
    %78 = vmatprep.subr.mxu0 0.0
    %79 = vmatpush1.msra.mxu0 %v62
    %80 = vmatprep.subr.mxu0 0.0
    %81 = vmatpush1.msra.mxu0 %v63
    %82 = vmatprep.subr.mxu0 0.0
    %83 = vmatpush1.msra.mxu0 %v64
    %84 = vmatprep.subr.mxu0 0.0
    %85 = vmatpush1.msra.mxu0 0.0
    %86 = vmatprep.subr.mxu0 0.0
    %87 = vmatpush1.msra.mxu0 0.0
    %88 = vmatprep.subr.mxu0 0.0
    %89 = vmatpush1.msra.mxu0 0.0
    %90 = vmatprep.subr.mxu0 0.0
    %91 = vmatpush1.msra.mxu0 0.0
    %92 = vmatprep.subr.mxu0 0.0
    %93 = vmatpush1.msra.mxu0 0.0
    %94 = vmatprep.subr.mxu0 0.0
    %95 = vmatpush1.msra.mxu0 0.0
    %96 = vmatprep.subr.mxu0 0.0
    %97 = vmatpush1.msra.mxu0 0.0
    %98 = vmatprep.subr.mxu0 0.0
    %99 = vmatpush1.msra.mxu0 0.0
    %100 = vmatprep.subr.mxu0 0.0
    %101 = vmatpush1.msra.mxu0 0.0
    %102 = vmatprep.subr.mxu0 0.0
    %103 = vmatpush1.msra.mxu0 0.0
    %104 = vmatprep.subr.mxu0 0.0
    %105 = vmatpush1.msra.mxu0 0.0
    %106 = vmatprep.subr.mxu0 0.0
    %107 = vmatpush1.msra.mxu0 0.0
    %108 = vmatprep.subr.mxu0 0.0
    %109 = vmatpush1.msra.mxu0 0.0
    %110 = vmatprep.subr.mxu0 0.0
    %111 = vmatpush1.msra.mxu0 0.0
    %112 = vmatprep.subr.mxu0 0.0
    %113 = vmatpush1.msra.mxu0 0.0
    %114 = vmatprep.subr.mxu0 0.0
    %115 = vmatpush1.msra.mxu0 0.0
    %116 = vmatprep.subr.mxu0 0.0
    %117 = vmatpush1.msra.mxu0 0.0
    %118 = vmatprep.subr.mxu0 0.0
    %119 = vmatpush1.msra.mxu0 0.0
    %120 = vmatprep.subr.mxu0 0.0
    %121 = vmatpush1.msra.mxu0 0.0
    %122 = vmatprep.subr.mxu0 0.0
    %123 = vmatpush1.msra.mxu0 0.0
    %124 = vmatprep.subr.mxu0 0.0
    %125 = vmatpush1.msra.mxu0 0.0
    %126 = vmatprep.subr.mxu0 0.0
    %127 = vmatpush1.msra.mxu0 0.0
    %128 = vmatprep.subr.mxu0 0.0
    %129 = vmatpush1.msra.mxu0 0.0
    %130 = vmatprep.subr.mxu0 0.0
    %131 = vmatpush1.msra.mxu0 0.0
    %132 = vmatprep.subr.mxu0 0.0
    %133 = vmatpush1.msra.mxu0 0.0
    %134 = vmatprep.subr.mxu0 0.0
    %135 = vmatpush1.msra.mxu0 0.0
    %136 = vmatprep.subr.mxu0 0.0
    %137 = vmatpush1.msra.mxu0 0.0
    %138 = vmatprep.subr.mxu0 0.0
    %139 = vmatpush1.msra.mxu0 0.0
    %140 = vmatprep.mubr.f32.mxu0 0.0
    %141 = vmatmul.mubr.f32.gmra.mrb[0].mxu0 %v74
    %v142 = vpop.f32.mrb[0].mxu0
    %v143 = vadd.f32 %v70, %v142
    %v144 = vpop.f32.mrb[0].mxu0
    %145 = vdwg.mxu0
    %v146 = vmax.f32 %v143, 0.0
    %v147 = vld [vmem:[#allocation7] sm:$0xff]
    %v148 = vld [vmem:[#allocation7 + $0x8] sm:$0xff]
    %v149 = vld [vmem:[#allocation7 + $0x10] sm:$0xff]
    %v150 = vld [vmem:[#allocation7 + $0x18] sm:$0xff]
    %v151 = vld [vmem:[#allocation7 + $0x20] sm:$0xff]
    %v152 = vld [vmem:[#allocation7 + $0x28] sm:$0xff]
    %v153 = vld [vmem:[#allocation7 + $0x30] sm:$0xff]
    %v154 = vld [vmem:[#allocation7 + $0x38] sm:$0xff]
    %v155 = vld [vmem:[#allocation7 + $0x40] sm:$0xff]
    %v156 = vld [vmem:[#allocation7 + $0x48] sm:$0xff]
    %v157 = vld [vmem:[#allocation7 + $0x50] sm:$0xff]
    %v158 = vld [vmem:[#allocation7 + $0x58] sm:$0xff]
    %v159 = vld [vmem:[#allocation7 + $0x60] sm:$0xff]
    %v160 = vld [vmem:[#allocation7 + $0x68] sm:$0xff]
    %v161 = vld [vmem:[#allocation7 + $0x70] sm:$0xff]
    %v162 = vld [vmem:[#allocation7 + $0x78] sm:$0xff]
    %v163 = vld [vmem:[#allocation7 + $0x80] sm:$0xff]
    %v164 = vld [vmem:[#allocation7 + $0x88] sm:$0xff]
    %v165 = vld [vmem:[#allocation7 + $0x90] sm:$0xff]
    %v166 = vld [vmem:[#allocation7 + $0x98] sm:$0xff]
    %v167 = vld [vmem:[#allocation7 + $0xa0] sm:$0xff]
    %v168 = vld [vmem:[#allocation7 + $0xa8] sm:$0xff]
    %v169 = vld [vmem:[#allocation7 + $0xb0] sm:$0xff]
    %v170 = vld [vmem:[#allocation7 + $0xb8] sm:$0xff]
    %v171 = vld [vmem:[#allocation7 + $0xc0] sm:$0xff]
    %v172 = vld [vmem:[#allocation7 + $0xc8] sm:$0xff]
    %v173 = vld [vmem:[#allocation7 + $0xd0] sm:$0xff]
    %v174 = vld [vmem:[#allocation7 + $0xd8] sm:$0xff]
    %v175 = vld [vmem:[#allocation7 + $0xe0] sm:$0xff]
    %v176 = vld [vmem:[#allocation7 + $0xe8] sm:$0xff]
    %v177 = vld [vmem:[#allocation7 + $0xf0] sm:$0xff]
    %v178 = vld [vmem:[#allocation7 + $0xf8] sm:$0xff]
    %v179 = vld [vmem:[%s4] sm:$0x3]
    %v181 = vlaneseq
    %v182 = vshrl.u32 %v181, 7
    %v183 = vsub.s32 0, %v182
    %v184 = vrot.slane %v179, %v183
    %v185 = vlaneseq
    %v186 = vshrl.u32 %v185, 7
    %v187 = vsub.s32 1, %v186
    %v188 = vrot.slane %v179, %v187
    %191 = vmatprep.subr.mxu0 %v148
    %192 = vmatpush1.msra.mxu0 %v147
    %193 = vmatprep.subr.mxu0 %v150
    %194 = vmatpush1.msra.mxu0 %v149
    %195 = vmatprep.subr.mxu0 %v152
    %196 = vmatpush1.msra.mxu0 %v151
    %197 = vmatprep.subr.mxu0 %v154
    %198 = vmatpush1.msra.mxu0 %v153
    %199 = vmatprep.subr.mxu0 %v156
    %200 = vmatpush1.msra.mxu0 %v155
    %201 = vmatprep.subr.mxu0 %v158
    %202 = vmatpush1.msra.mxu0 %v157
    %203 = vmatprep.subr.mxu0 %v160
    %204 = vmatpush1.msra.mxu0 %v159
    %205 = vmatprep.subr.mxu0 %v162
    %206 = vmatpush1.msra.mxu0 %v161
    %207 = vmatprep.subr.mxu0 %v164
    %208 = vmatpush1.msra.mxu0 %v163
    %209 = vmatprep.subr.mxu0 %v166
    %210 = vmatpush1.msra.mxu0 %v165
    %211 = vmatprep.subr.mxu0 %v168
    %212 = vmatpush1.msra.mxu0 %v167
    %213 = vmatprep.subr.mxu0 %v170
    %214 = vmatpush1.msra.mxu0 %v169
    %215 = vmatprep.subr.mxu0 %v172
    %216 = vmatpush1.msra.mxu0 %v171
    %217 = vmatprep.subr.mxu0 %v174
    %218 = vmatpush1.msra.mxu0 %v173
    %219 = vmatprep.subr.mxu0 %v176
    %220 = vmatpush1.msra.mxu0 %v175
    %221 = vmatprep.subr.mxu0 %v178
    %222 = vmatpush1.msra.mxu0 %v177
    %223 = vmatprep.subr.mxu0 0.0
    %224 = vmatpush1.msra.mxu0 0.0
    %225 = vmatprep.subr.mxu0 0.0
    %226 = vmatpush1.msra.mxu0 0.0
    %227 = vmatprep.subr.mxu0 0.0
    %228 = vmatpush1.msra.mxu0 0.0
    %229 = vmatprep.subr.mxu0 0.0
    %230 = vmatpush1.msra.mxu0 0.0
    %231 = vmatprep.subr.mxu0 0.0
    %232 = vmatpush1.msra.mxu0 0.0
    %233 = vmatprep.subr.mxu0 0.0
    %234 = vmatpush1.msra.mxu0 0.0
    %235 = vmatprep.subr.mxu0 0.0
    %236 = vmatpush1.msra.mxu0 0.0
    %237 = vmatprep.subr.mxu0 0.0
    %238 = vmatpush1.msra.mxu0 0.0
    %239 = vmatprep.subr.mxu0 0.0
    %240 = vmatpush1.msra.mxu0 0.0
    %241 = vmatprep.subr.mxu0 0.0
    %242 = vmatpush1.msra.mxu0 0.0
    %243 = vmatprep.subr.mxu0 0.0
    %244 = vmatpush1.msra.mxu0 0.0
    %245 = vmatprep.subr.mxu0 0.0
    %246 = vmatpush1.msra.mxu0 0.0
    %247 = vmatprep.subr.mxu0 0.0
    %248 = vmatpush1.msra.mxu0 0.0
    %249 = vmatprep.subr.mxu0 0.0
    %250 = vmatpush1.msra.mxu0 0.0
    %251 = vmatprep.subr.mxu0 0.0
    %252 = vmatpush1.msra.mxu0 0.0
    %253 = vmatprep.subr.mxu0 0.0
    %254 = vmatpush1.msra.mxu0 0.0
    %255 = vmatprep.mubr.f32.mxu0 0.0
    %256 = vmatmul.mubr.f32.gmra.mrb[0].mxu0 %v146
    %v257 = vpop.f32.mrb[0].mxu0
    %v258 = vadd.f32 %v184, %v257
    %v259 = vpop.f32.mrb[0].mxu0
    %v260 = vadd.f32 %v188, %v259
    %261 = vdwg.mxu0
    %v262 = vmax.f32 %v258, 0.0
    %v263 = vmax.f32 %v260, 0.0
    %v266 = vcombine.low %v262, %v263
    %268 = vst [vmem:[#allocation8] sm:$0xff] %v266
    // Predicated region
    $region34: #{tpu_custom_call.1} parent=1 // pred_check
      _
    $region35: #{tpu_custom_call.1} parent=1 // pred_check_branch
      %270 = sbr.rel (0) target = $region37
    $region36: #{tpu_custom_call.1} parent=1 // pred_region
      %s272 = ssub.s32 128, 128
      %273 = vsyncadd [#allocation4], %s272
      %s275 = sshll.u32 [#allocation8], 4
      %s276 = int_to_ptr.vmem [resolvable:$true] %s275
      %278 = dma.vmem_to_hbm [thread:$0]  %s276, 128, %s5, [#allocation4]
    $region37: #{tpu_custom_call.1} parent=1 // pred_fallthru
      _
    // Predicated region
    $region38: #{tpu_custom_call.1} parent=1 // pred_check
      _
    $region39: #{tpu_custom_call.1} parent=1 // pred_check_branch
      %280 = sbr.rel (0) target = $region41
    $region40: #{tpu_custom_call.1} parent=1 // pred_region
      %281 = dma.done [#allocation4], 128
    $region41: #{tpu_custom_call.1} parent=1 // pred_fallthru
      _
    %282 = vsyncpa [#allocation3], 1
    %283 = vsyncpa [#allocation6], 1
    %284 = vsyncpa [#allocation4], 1

</llo_original>
